<compile_context>
chip_gen: v5e
topology: v5e:2x2
jax: 0.10.0
libtpu: 0.0.40
codegen_flags: <defaults>
</compile_context>

<pallas_src>
import jax
import jax.numpy as jnp
from jax.experimental import pallas as pl
from jax.experimental.pallas import tpu as pltpu


# ----------------------------------------------------------------------------
# Kernels
# ----------------------------------------------------------------------------
def _gate_kernel_bias(x_ref, w_ref, b_ref, o_ref, acc_ref):
    # x_ref: (1, tk); w_ref: (tn, tk); b_ref: (1, tn); o_ref: (1, tn); acc: (1, tn) f32
    k = pl.program_id(1)

    @pl.when(k == 0)
    def _():
        acc_ref[...] = jnp.zeros_like(acc_ref)

    # Contract the 2H axis: (1, tk) . (tn, tk)^T -> (1, tn), f32 MXU accumulation.
    # (Transposed-RHS contraction is the standard TPU lowering, cf. q @ k.T.)
    acc_ref[...] += jax.lax.dot_general(
        x_ref[...], w_ref[...],
        dimension_numbers=(((1,), (1,)), ((), ())),
        preferred_element_type=jnp.float32)

    @pl.when(k == pl.num_programs(1) - 1)
    def _():
        z = acc_ref[...] + b_ref[...].astype(jnp.float32)
        o_ref[...] = jax.nn.sigmoid(z).astype(o_ref.dtype)


def _gate_kernel_nobias(x_ref, w_ref, o_ref, acc_ref):
    k = pl.program_id(1)

    @pl.when(k == 0)
    def _():
        acc_ref[...] = jnp.zeros_like(acc_ref)

    acc_ref[...] += jax.lax.dot_general(
        x_ref[...], w_ref[...],
        dimension_numbers=(((1,), (1,)), ((), ())),
        preferred_element_type=jnp.float32)

    @pl.when(k == pl.num_programs(1) - 1)
    def _():
        o_ref[...] = jax.nn.sigmoid(acc_ref[...]).astype(o_ref.dtype)


# ----------------------------------------------------------------------------
# Tiling helpers
# ----------------------------------------------------------------------------
def _vmem_capacity_bytes():
    try:
        return int(pltpu.get_tpu_info().vmem_capacity_bytes)
    except Exception:
        return 64 * 1024 * 1024  # conservative default: v7x per-TC VMEM


def _fit_tile(dim, cap_elems):
    """Largest multiple of 128 that divides `dim` (itself a 128-multiple) and is
    <= max(cap_elems, 128)."""
    t = min(dim, max(128, (cap_elems // 128) * 128))
    while dim % t:
        t -= 128
    return t


def _pick_tiles(hidden, k_dim, w_itemsize, budget_bytes):
    """Pick (tn over H, tk over 2H).  One weight tile stays <= budget_bytes (it is
    double-buffered by the pipeline); the output axis gets >=2 tiles when H
    permits so the 'parallel' axis shards across 2-TC chips and the pipeline can
    overlap DMA with compute (one extra ~0.35us step is negligible vs the stream)."""
    row_bytes = k_dim * w_itemsize
    if 128 * row_bytes <= budget_bytes:
        # Full-K stripes: contiguous rows of the (H, 2H) weight -> long DMA bursts.
        tn = _fit_tile(hidden, budget_bytes // row_bytes)
        if tn == hidden and hidden > 128:
            tn = _fit_tile(hidden, hidden // 2)  # guarantee >=2 output tiles
        tk = k_dim
    else:
        # Very large H: also tile the contraction axis (keeps v7x's 64 MiB bounded,
        # accumulate in f32 scratch across the K grid axis).
        tn = 128
        tk = _fit_tile(k_dim, budget_bytes // (tn * w_itemsize))
    return tn, tk


# ----------------------------------------------------------------------------
# Wrapper
# ----------------------------------------------------------------------------
def sentence_state_gate(prev_g, h, weight, bias=None, *,
                        min_weight_bytes_for_pallas=2 * 1024 * 1024,
                        _tile_budget_bytes=None):
    """prev_g, h: (H,); weight: (H, 2H) in native PyTorch layout (any float dtype,
    streamed as stored -- keep it bf16 at rest for half the HBM bytes); bias: (H,) or None."""
    hidden = prev_g.shape[0]
    k_dim = 2 * hidden
    assert weight.shape == (hidden, k_dim)
    out_dtype = prev_g.dtype

    # Tiny glue: concat the (2H,) activation row and match the weight's dtype.
    x = jnp.concatenate([prev_g, h], axis=0).reshape(1, k_dim).astype(weight.dtype)

    w_bytes = weight.size * weight.dtype.itemsize
    use_pallas = (hidden % 128 == 0) and (w_bytes >= min_weight_bytes_for_pallas)

    if not use_pallas:
        # Small or non-lane-aligned H: a standalone pallas_call's dispatch overhead
        # dominates; let XLA fuse matvec + bias + sigmoid instead.
        # TODO(synk): pad H up to a 128 multiple instead of falling back for large
        # H that is not lane-aligned.
        z = jax.lax.dot_general(x, weight,
                                dimension_numbers=(((1,), (1,)), ((), ())),
                                preferred_element_type=jnp.float32)
        if bias is not None:
            z = z + bias.astype(jnp.float32).reshape(1, hidden)
        return jax.nn.sigmoid(z).astype(out_dtype).reshape(hidden)

    # ---- Pallas path -------------------------------------------------------
    vmem_cap = _vmem_capacity_bytes()
    budget = _tile_budget_bytes if _tile_budget_bytes is not None else \
        min(16 * 1024 * 1024, max(2 * 1024 * 1024, vmem_cap // 6))
    w_item = weight.dtype.itemsize
    tn, tk = _pick_tiles(hidden, k_dim, w_item, budget)
    grid = (hidden // tn, k_dim // tk)

    in_specs = [
        pl.BlockSpec((1, tk), lambda j, k: (0, k)),    # x: tiny activation row
        pl.BlockSpec((tn, tk), lambda j, k: (j, k)),   # weight: streamed, native layout
    ]
    operands = [x, weight]
    if bias is not None:
        in_specs.append(pl.BlockSpec((1, tn), lambda j, k: (0, j)))
        operands.append(bias.reshape(1, hidden))
        kernel = _gate_kernel_bias
    else:
        kernel = _gate_kernel_nobias

    # Right-size the VMEM budget: double-buffered weight + x tiles, bias, out, acc.
    out_item = jnp.dtype(out_dtype).itemsize
    bias_item = bias.dtype.itemsize if bias is not None else 0
    vmem_need = (2 * tn * tk * w_item
                 + 2 * tk * w_item
                 + 2 * tn * bias_item
                 + 2 * tn * out_item
                 + tn * 4)
    vmem_limit = min(int(vmem_need * 3 // 2) + (4 * 1024 * 1024), 100 * 1024 * 1024)

    out = pl.pallas_call(
        kernel,
        out_shape=jax.ShapeDtypeStruct((1, hidden), out_dtype),
        grid=grid,
        in_specs=in_specs,
        out_specs=pl.BlockSpec((1, tn), lambda j, k: (0, j)),
        scratch_shapes=[pltpu.VMEM((1, tn), jnp.float32)],
        compiler_params=pltpu.CompilerParams(
            dimension_semantics=("parallel", "arbitrary"),
            vmem_limit_bytes=vmem_limit),
    )(*operands)
    return out.reshape(hidden)


# ----------------------------------------------------------------------------
# Reference + tests
# ----------------------------------------------------------------------------
def _reference(prev_g, h, weight, bias):
    z = weight.astype(jnp.float32) @ jnp.concatenate([prev_g, h]).astype(jnp.float32)
    if bias is not None:
        z = z + bias.astype(jnp.float32)
    return jax.nn.sigmoid(z)


if __name__ == "__main__":
    key = jax.random.PRNGKey(0)

    def make_inputs(key, hidden, with_bias):
        k_g, k_h, k_w, k_b, key = jax.random.split(key, 5)
        bound = 1.0 / jnp.sqrt(2.0 * hidden)
        prev_g = jax.random.normal(k_g, (hidden,), jnp.float32)
        h = jax.random.normal(k_h, (hidden,), jnp.float32)
        weight = jax.random.uniform(k_w, (hidden, 2 * hidden), jnp.float32, -bound, bound)
        bias = (jax.random.uniform(k_b, (hidden,), jnp.float32, -bound, bound)
                if with_bias else None)
        return key, prev_g, h, weight, bias

    # ---- Test 1: H = 32, f32, with bias -> small/unaligned fused-XLA fallback path.
    key, prev_g, h, weight, bias = make_inputs(key, 32, True)
    out = jax.block_until_ready(sentence_state_gate(prev_g, h, weight, bias))
    ref = _reference(prev_g, h, weight, bias)
    assert out.shape == (32,)
    assert jnp.allclose(out, ref, atol=1e-5, rtol=1e-5)

    # ---- Test 2: H = 256, f32, with bias -> Pallas path, 2 output tiles (tn=128).
    key, prev_g, h, weight, bias = make_inputs(key, 256, True)
    out = jax.block_until_ready(
        sentence_state_gate(prev_g, h, weight, bias, min_weight_bytes_for_pallas=0))
    ref = _reference(prev_g, h, weight, bias)
    assert out.shape == (256,)
    assert jnp.allclose(out, ref, atol=1e-5, rtol=1e-5)

    # ---- Test 3: H = 512, weight stored bf16 at rest (cast ONCE outside the hot
    #              path), no bias -> Pallas path, 2 output tiles, f32 MXU accum.
    key, prev_g, h, weight, _ = make_inputs(key, 512, False)
    weight_bf16 = jax.block_until_ready(weight.astype(jnp.bfloat16))  # "at rest"
    out = jax.block_until_ready(
        sentence_state_gate(prev_g, h, weight_bf16, None, min_weight_bytes_for_pallas=0))
    ref = _reference(prev_g, h, weight, None)
    assert out.shape == (512,)
    assert jnp.allclose(out, ref, atol=2e-2, rtol=2e-2)

    # ---- Test 4: H = 512, f32, with bias, artificially tiny tile budget to
    #              exercise the K-tiled accumulator path (grid = (4, 4)).
    key, prev_g, h, weight, bias = make_inputs(key, 512, True)
    out = jax.block_until_ready(
        sentence_state_gate(prev_g, h, weight, bias,
                            min_weight_bytes_for_pallas=0,
                            _tile_budget_bytes=192 * 1024))
    ref = _reference(prev_g, h, weight, bias)
    assert out.shape == (512,)
    assert jnp.allclose(out, ref, atol=1e-5, rtol=1e-5)

    print("KERNEL_OK")
</pallas_src>

<mosaic_0001>
module attributes {stable_mosaic.version = 11 : i64} {
  func.func @_gate_kernel_bias(%arg0: i32, %arg1: i32, %arg2: memref<1x512xf32, #tpu.memory_space<vmem>>, %arg3: memref<128x512xf32, #tpu.memory_space<vmem>>, %arg4: memref<1x128xf32, #tpu.memory_space<vmem>>, %arg5: memref<1x128xf32, #tpu.memory_space<vmem>>, %arg6: memref<1x128xf32, #tpu.memory_space<vmem>>) attributes {dimension_semantics = [#tpu.dimension_semantics<parallel>, #tpu.dimension_semantics<arbitrary>], iteration_bounds = array<i64: 2, 1>, scalar_prefetch = 0 : i64, scratch_operands = 1 : i64, tpu.core_type = #tpu.core_type<tc>, window_params = [{transform_indices = @transform_0, window_bounds = array<i64: 1, 512>}, {transform_indices = @transform_1, window_bounds = array<i64: 128, 512>}, {transform_indices = @transform_2, window_bounds = array<i64: 1, 128>}, {transform_indices = @transform_3, window_bounds = array<i64: 1, 128>}]} {
    %c0_i32 = arith.constant 0 : i32
    %0 = arith.cmpi eq, %arg1, %c0_i32 : i32
    %1 = arith.extui %0 : i1 to i32
    %c0_i32_0 = arith.constant 0 : i32
    %2 = arith.cmpi ne, %1, %c0_i32_0 : i32
    scf.if %2 {
      %cst_10 = arith.constant 0.000000e+00 : f32
      %12 = vector.broadcast %cst_10 : f32 to vector<1x128xf32>
      %c0_11 = arith.constant 0 : index
      %c0_12 = arith.constant 0 : index
      %13 = vector.load %arg6[%c0_11, %c0_12] : memref<1x128xf32, #tpu.memory_space<vmem>>, vector<1x128xf32>
      tpu.vector_store %arg6[%c0_11, %c0_12], %12 {strides = array<i32>} : memref<1x128xf32, #tpu.memory_space<vmem>>, vector<1x128xf32>,
    } else {
    }
    %c0 = arith.constant 0 : index
    %c0_1 = arith.constant 0 : index
    %3 = vector.load %arg6[%c0, %c0_1] : memref<1x128xf32, #tpu.memory_space<vmem>>, vector<1x128xf32>
    %c0_2 = arith.constant 0 : index
    %c0_3 = arith.constant 0 : index
    %4 = vector.load %arg2[%c0_2, %c0_3] : memref<1x512xf32, #tpu.memory_space<vmem>>, vector<1x512xf32>
    %c0_4 = arith.constant 0 : index
    %c0_5 = arith.constant 0 : index
    %5 = vector.load %arg3[%c0_4, %c0_5] : memref<128x512xf32, #tpu.memory_space<vmem>>, vector<128x512xf32>
    %cst = arith.constant dense<0.000000e+00> : vector<1x128xf32>
    %6 = tpu.matmul %4, %5, %cst {dimension_numbers = #tpu.dot_dimension_numbers<[1], [1], [0], [0], [0, 0, 1, 0], [], []>} : vector<1x512xf32>, vector<128x512xf32>, vector<1x128xf32> -> vector<1x128xf32>
    %7 = arith.addf %3, %6 : vector<1x128xf32>
    %c0_6 = arith.constant 0 : index
    %c0_7 = arith.constant 0 : index
    %8 = vector.load %arg6[%c0_6, %c0_7] : memref<1x128xf32, #tpu.memory_space<vmem>>, vector<1x128xf32>
    tpu.vector_store %arg6[%c0_6, %c0_7], %7 {strides = array<i32>} : memref<1x128xf32, #tpu.memory_space<vmem>>, vector<1x128xf32>,
    %c0_i32_8 = arith.constant 0 : i32
    %9 = arith.cmpi eq, %arg1, %c0_i32_8 : i32
    %10 = arith.extui %9 : i1 to i32
    %c0_i32_9 = arith.constant 0 : i32
    %11 = arith.cmpi ne, %10, %c0_i32_9 : i32
    scf.if %11 {
      %c0_10 = arith.constant 0 : index
      %c0_11 = arith.constant 0 : index
      %12 = vector.load %arg6[%c0_10, %c0_11] : memref<1x128xf32, #tpu.memory_space<vmem>>, vector<1x128xf32>
      %c0_12 = arith.constant 0 : index
      %c0_13 = arith.constant 0 : index
      %13 = vector.load %arg4[%c0_12, %c0_13] : memref<1x128xf32, #tpu.memory_space<vmem>>, vector<1x128xf32>
      %14 = arith.addf %12, %13 : vector<1x128xf32>
      %15 = arith.negf %14 : vector<1x128xf32>
      %16 = math.exp %15 : vector<1x128xf32>
      %cst_14 = arith.constant 1.000000e+00 : f32
      %17 = vector.broadcast %cst_14 : f32 to vector<1x128xf32>
      %18 = arith.addf %17, %16 : vector<1x128xf32>
      %19 = arith.divf %17, %18 : vector<1x128xf32>
      %c0_15 = arith.constant 0 : index
      %c0_16 = arith.constant 0 : index
      %20 = vector.load %arg5[%c0_15, %c0_16] : memref<1x128xf32, #tpu.memory_space<vmem>>, vector<1x128xf32>
      tpu.vector_store %arg5[%c0_15, %c0_16], %19 {strides = array<i32>} : memref<1x128xf32, #tpu.memory_space<vmem>>, vector<1x128xf32>,
    } else {
    }
    return
  }
  func.func @transform_0(%arg0: i32, %arg1: i32) -> (i32, i32) {
    %c0_i32 = arith.constant 0 : i32
    %c0_i32_0 = arith.constant 0 : i32
    return %c0_i32, %arg1 : i32, i32
  }
  func.func @transform_1(%arg0: i32, %arg1: i32) -> (i32, i32) {
    %c0_i32 = arith.constant 0 : i32
    return %arg0, %arg1 : i32, i32
  }
  func.func @transform_2(%arg0: i32, %arg1: i32) -> (i32, i32) {
    %c0_i32 = arith.constant 0 : i32
    %c0_i32_0 = arith.constant 0 : i32
    return %c0_i32, %arg0 : i32, i32
  }
  func.func @transform_3(%arg0: i32, %arg1: i32) -> (i32, i32) {
    %c0_i32 = arith.constant 0 : i32
    %c0_i32_0 = arith.constant 0 : i32
    return %c0_i32, %arg0 : i32, i32
  }
}

</mosaic_0001>

<llo_original>
// kernel: tpu_custom_call.1
$region0: #{tpu_custom_call.1}
  #allocation0 [shape = 'u32[]', space=smem, size = 0x4, offset = 0x4, fixed_abs, tag = 'smem constant byte address 0x4 - core index']
  #allocation1 [shape = 'u32[72,128]{1,0:T(1,128)}', space=vmem, size = 0x9000, scoped, tag = 'internal scratch']
  #allocation2 [shape = 'f32[1,128]{1,0:T(1,128)}', space=vmem, size = 0x200, scoped, tag = 'scratch operand']
  %s0 = inlined_call_operand.hbm [shape: f32[1,512], index: 0, kind: input, shape index: {}]
  %s1 = inlined_call_operand.hbm [shape: f32[256,512], index: 1, kind: input, shape index: {}]
  %s2 = inlined_call_operand.hbm [shape: f32[1,256], index: 2, kind: input, shape index: {}]
  %s3 = inlined_call_operand.hbm [shape: f32[1,256], index: 3, kind: output, shape index: {}]
  %s4 = sld [smem:[#allocation0]]
  $region65: #{tpu_custom_call.1} parent=0
    _
  %s6 = ssub.s32 1, %s4
  %s7 = scalar_select 0, %s6, %s4
  $region1: #{tpu_custom_call.1} parent=0
    #allocation3 [shape = 'u8[2048]{0}', space=vmem, size = 0x800, scoped, tag = 'input window, operand 0, single buffered']
    #allocation4 [shape = 's32[2]{0}', space=sflag, size = 0x8, scoped, tag = 'scoped memory for tpu_custom_call.1']
    #allocation5 [shape = 's32[2]{0}', space=sflag, size = 0x8, scoped, tag = 'scoped memory for tpu_custom_call.1']
    #allocation6 [shape = 'u8[524288]{0}', space=vmem, size = 0x80000, scoped, tag = 'input window, operand 1']
    #allocation7 [shape = 's32[2]{0}', space=sflag, size = 0x8, scoped, tag = 'scoped memory for tpu_custom_call.1']
    #allocation8 [shape = 'u8[1024]{0}', space=vmem, size = 0x400, scoped, tag = 'input window, operand 2']
    #allocation9 [shape = 'u8[1024]{0}', space=vmem, size = 0x400, scoped, tag = 'output window, operand 0']
    %8 = vsyncpa [#allocation4], 0
    %9 = vsyncpa [#allocation7], 0
    %s10 = scalar_lea.sflag [#allocation7], 1
    %11 = vsyncpa %s10, 0
    %12 = vsyncpa [#allocation5], 0
    %s13 = scalar_lea.sflag [#allocation5], 1
    %14 = vsyncpa %s13, 0
    loop: start=0, step=1, limit=4
    $region2: #{tpu_custom_call.1} parent=1 // loop_pre_header
      _
    $region3: #{tpu_custom_call.1} parent=1 // loop_header
      %s16 = sphi 0, %s20
      %p17 = scmp.ge.s32.totalorder %s16, 4
      %s23 = sphi 0, %s35
      %s24 = sphi 0, %s31
      %s25 = sphi 0, %s23
      %s26 = sphi 0, %s24
      %s27 = sphi 0, %s25
      %s28 = sphi 0, %s26
      %s38 = sphi 0, %s40
      %s41 = sphi 0, %s38
      %s42 = sphi 0, %s41
      %s58 = sphi 0, %s42
      %s66 = sphi 0, %s68
      %s69 = sphi 0, %s66
      %s70 = sphi 0, %s69
      %s86 = sphi 0, %s70
      %s92 = sphi 0, %s94
      %s95 = sphi 0, %s92
      %s96 = sphi 0, %s95
      %s112 = sphi 0, %s96
      %s118 = sphi 0, %s120
      %s121 = sphi 0, %s118
      %s122 = sphi 0, %s121
      %s138 = sphi 0, %s122
    $region4: #{tpu_custom_call.1} parent=1 // loop_header_branch
      %19 = sbr.rel (%p17) target = $region8
    $region5: #{tpu_custom_call.1} parent=1 // loop_body
      %s21 = ssub.s32 %s16, 1
      %s22 = ssub.s32 %s16, 2
      %s29 = sadd.s32 1, %s24
      %p30 = scmp.ge.s32.totalorder %s29, 1
      %s31 = scalar_select %p30, 0, %s29
      %s32 = sadd.s32 1, %s23
      %s33 = scalar_select %p30, %s32, %s23
      %p34 = scmp.ge.s32.totalorder %s33, 2
      %s35 = scalar_select %p34, 0, %s33
      %s36 = ssub.s32 %s24, %s31
      %p37 = scmp.eq.s32.totalorder %s36, 0
      %s39 = sadd.s32 %s38, 1
      %s40 = scalar_select %p37, %s38, %s39
      %p43 = pneg %p37
      %p44 = scmp.eq.s32.totalorder %s16, 1
      %p45 = por %p43, %p44
      %p46 = scmp.ne.s32.totalorder %s38, %s41
      %p47 = scmp.eq.s32.totalorder %s16, 0
      %p48 = por %p46, %p47
      %p49 = scmp.ne.s32.totalorder %s38, %s41
      %p50 = scmp.eq.s32.totalorder %s21, 1
      %p51 = por %p49, %p50
      %p52 = scmp.ne.s32.totalorder %s41, %s42
      %p53 = scmp.eq.s32.totalorder %s21, 0
      %p54 = por %p52, %p53
      %p55 = scmp.ne.s32.totalorder %s41, %s42
      %p56 = scmp.eq.s32.totalorder %s22, 1
      %p57 = por %p55, %p56
      %p59 = scmp.ne.s32.totalorder %s42, %s58
      %p60 = scmp.eq.s32.totalorder %s22, 0
      %p61 = por %p59, %p60
      %s62 = ssub.s32 %s23, %s35
      %s63 = ssub.s32 %s24, %s31
      %s64 = sor.u32 %s62, %s63
      %p65 = scmp.eq.s32.totalorder %s64, 0
      %s67 = sadd.s32 %s66, 1
      %s68 = scalar_select %p65, %s66, %s67
      %p71 = pneg %p65
      %p72 = scmp.eq.s32.totalorder %s16, 1
      %p73 = por %p71, %p72
      %p74 = scmp.ne.s32.totalorder %s66, %s69
      %p75 = scmp.eq.s32.totalorder %s16, 0
      %p76 = por %p74, %p75
      %p77 = scmp.ne.s32.totalorder %s66, %s69
      %p78 = scmp.eq.s32.totalorder %s21, 1
      %p79 = por %p77, %p78
      %p80 = scmp.ne.s32.totalorder %s69, %s70
      %p81 = scmp.eq.s32.totalorder %s21, 0
      %p82 = por %p80, %p81
      %p83 = scmp.ne.s32.totalorder %s69, %s70
      %p84 = scmp.eq.s32.totalorder %s22, 1
      %p85 = por %p83, %p84
      %p87 = scmp.ne.s32.totalorder %s70, %s86
      %p88 = scmp.eq.s32.totalorder %s22, 0
      %p89 = por %p87, %p88
      %s90 = ssub.s32 %s23, %s35
      %p91 = scmp.eq.s32.totalorder %s90, 0
      %s93 = sadd.s32 %s92, 1
      %s94 = scalar_select %p91, %s92, %s93
      %p97 = pneg %p91
      %p98 = scmp.eq.s32.totalorder %s16, 1
      %p99 = por %p97, %p98
      %p100 = scmp.ne.s32.totalorder %s92, %s95
      %p101 = scmp.eq.s32.totalorder %s16, 0
      %p102 = por %p100, %p101
      %p103 = scmp.ne.s32.totalorder %s92, %s95
      %p104 = scmp.eq.s32.totalorder %s21, 1
      %p105 = por %p103, %p104
      %p106 = scmp.ne.s32.totalorder %s95, %s96
      %p107 = scmp.eq.s32.totalorder %s21, 0
      %p108 = por %p106, %p107
      %p109 = scmp.ne.s32.totalorder %s95, %s96
      %p110 = scmp.eq.s32.totalorder %s22, 1
      %p111 = por %p109, %p110
      %p113 = scmp.ne.s32.totalorder %s96, %s112
      %p114 = scmp.eq.s32.totalorder %s22, 0
      %p115 = por %p113, %p114
      %s116 = ssub.s32 %s23, %s35
      %p117 = scmp.eq.s32.totalorder %s116, 0
      %s119 = sadd.s32 %s118, 1
      %s120 = scalar_select %p117, %s118, %s119
      %p123 = pneg %p117
      %p124 = scmp.eq.s32.totalorder %s16, 1
      %p125 = por %p123, %p124
      %p126 = scmp.ne.s32.totalorder %s118, %s121
      %p127 = scmp.eq.s32.totalorder %s16, 0
      %p128 = por %p126, %p127
      %p129 = scmp.ne.s32.totalorder %s118, %s121
      %p130 = scmp.eq.s32.totalorder %s21, 1
      %p131 = por %p129, %p130
      %p132 = scmp.ne.s32.totalorder %s121, %s122
      %p133 = scmp.eq.s32.totalorder %s21, 0
      %p134 = por %p132, %p133
      %p135 = scmp.ne.s32.totalorder %s121, %s122
      %p136 = scmp.eq.s32.totalorder %s22, 1
      %p137 = por %p135, %p136
      %p139 = scmp.ne.s32.totalorder %s122, %s138
      %p140 = scmp.eq.s32.totalorder %s22, 0
      %p141 = por %p139, %p140
      %p142 = scmp.le.s32.totalorder 1, %s16
      %p143 = scmp.lt.s32.totalorder %s16, 3
      %p144 = pnand %p142, %p143
      %p145 = pneg %p144
      // Predicated region
      $region9: #{tpu_custom_call.1} parent=5 // pred_check
        _
      $region10: #{tpu_custom_call.1} parent=5 // pred_check_branch
        %147 = sbr.rel (%p144) target = $region12
      $region11: #{tpu_custom_call.1} parent=5 // pred_region
        %s148 = ssub.s32 %s16, 1
        // Predicated region
        $region13: #{tpu_custom_call.1} parent=11 // pred_check
          %p149 = pneg %p54
        $region14: #{tpu_custom_call.1} parent=11 // pred_check_branch
          %151 = sbr.rel (%p149) target = $region16
        $region15: #{tpu_custom_call.1} parent=11 // pred_region
          %s152 = smul.u32 4, %s26
          %154 = vsyncadd [#allocation4], 0
          %s155 = scalar_lea.hbm %s0, %s152
          %s157 = sshll.u32 %s155, 4
          %s158 = int_to_ptr.hbm [resolvable:$true] %s157
          %s159 = sshll.u32 [#allocation3], 4
          %s160 = int_to_ptr.vmem [resolvable:$true] %s159
          %162 = dma.hbm_to_vmem [thread:$0]  %s158, 64, %s160, [#allocation4]
        $region16: #{tpu_custom_call.1} parent=11 // pred_fallthru
          _
      $region12: #{tpu_custom_call.1} parent=5 // pred_fallthru
        _
      %p163 = scmp.lt.s32.totalorder %s16, 2
      // Predicated region
      $region17: #{tpu_custom_call.1} parent=5 // pred_check
        %p164 = pneg %p163
      $region18: #{tpu_custom_call.1} parent=5 // pred_check_branch
        %166 = sbr.rel (%p164) target = $region20
      $region19: #{tpu_custom_call.1} parent=5 // pred_region
        // Predicated region
        $region21: #{tpu_custom_call.1} parent=19 // pred_check
          %p167 = pneg %p76
        $region22: #{tpu_custom_call.1} parent=19 // pred_check_branch
          %169 = sbr.rel (%p167) target = $region24
        $region23: #{tpu_custom_call.1} parent=19 // pred_region
          %s170 = sand.u32 %s16, 1
          %s171 = scalar_lea.sflag [#allocation7], %s170
          %s172 = sand.u32 %s66, 1
          %s173 = smul.addr %s172, 512
          %s174 = scalar_lea.vmem [#allocation6], %s173
          %s175 = smul.u32 16, %s23
          %s176 = smul.u32 4, %s24
          %178 = vsyncadd %s171, 0
          %s179 = smul.addr %s175, 4
          %s180 = sadd.s32 %s176, %s179
          %s181 = smul.addr %s180, 8
          %s182 = scalar_lea.hbm %s1, %s181
          %s183 = sshll.u32 %s182, 4
          %s184 = int_to_ptr.hbm [resolvable:$true] %s183
          %s185 = sshll.u32 %s174, 4
          %s186 = int_to_ptr.vmem [resolvable:$true] %s185
          %191 = dma.hbm_to_vmem [thread:$0]  %s184, 8192, %s186, %s171, 512, 512, 32
        $region24: #{tpu_custom_call.1} parent=19 // pred_fallthru
          _
        // Predicated region
        $region25: #{tpu_custom_call.1} parent=19 // pred_check
          %p192 = pneg %p102
        $region26: #{tpu_custom_call.1} parent=19 // pred_check_branch
          %194 = sbr.rel (%p192) target = $region28
        $region27: #{tpu_custom_call.1} parent=19 // pred_region
          %s195 = sand.u32 %s16, 1
          %s196 = scalar_lea.sflag [#allocation7], %s195
          %s197 = sand.u32 %s92, 1
          %s198 = scalar_lea.vmem [#allocation8], %s197
          %200 = vsyncadd %s196, 0
          %s201 = scalar_lea.hbm %s2, %s23
          %s203 = sshll.u32 %s201, 4
          %s204 = int_to_ptr.hbm [resolvable:$true] %s203
          %s205 = sshll.u32 %s198, 4
          %s206 = int_to_ptr.vmem [resolvable:$true] %s205
          %208 = dma.hbm_to_vmem [thread:$0]  %s204, 16, %s206, %s196
        $region28: #{tpu_custom_call.1} parent=19 // pred_fallthru
          _
      $region20: #{tpu_custom_call.1} parent=5 // pred_fallthru
        _
      %p209 = scmp.le.s32.totalorder 1, %s16
      %p210 = scmp.lt.s32.totalorder %s16, 3
      %p211 = pnand %p209, %p210
      %p212 = pneg %p211
      // Predicated region
      $region29: #{tpu_custom_call.1} parent=5 // pred_check
        _
      $region30: #{tpu_custom_call.1} parent=5 // pred_check_branch
        %214 = sbr.rel (%p211) target = $region32
      $region31: #{tpu_custom_call.1} parent=5 // pred_region
        %s215 = ssub.s32 %s16, 1
        // Predicated region
        $region33: #{tpu_custom_call.1} parent=31 // pred_check
          %p216 = pneg %p54
        $region34: #{tpu_custom_call.1} parent=31 // pred_check_branch
          %218 = sbr.rel (%p216) target = $region36
        $region35: #{tpu_custom_call.1} parent=31 // pred_region
          %220 = dma.done [#allocation4], 64
        $region36: #{tpu_custom_call.1} parent=31 // pred_fallthru
          _
        %s221 = sand.u32 %s21, 1
        %s222 = scalar_lea.sflag [#allocation7], %s221
        %s223 = sand.u32 %s69, 1
        %s224 = smul.addr %s223, 512
        %s225 = scalar_lea.vmem [#allocation6], %s224
        // Predicated region
        $region37: #{tpu_custom_call.1} parent=31 // pred_check
          %p226 = pneg %p82
        $region38: #{tpu_custom_call.1} parent=31 // pred_check_branch
          %228 = sbr.rel (%p226) target = $region40
        $region39: #{tpu_custom_call.1} parent=31 // pred_region
          %230 = dma.done %s222, 8192
        $region40: #{tpu_custom_call.1} parent=31 // pred_fallthru
          _
        %s231 = sand.u32 %s21, 1
        %s232 = scalar_lea.sflag [#allocation7], %s231
        %s233 = sand.u32 %s95, 1
        %s234 = scalar_lea.vmem [#allocation8], %s233
        // Predicated region
        $region41: #{tpu_custom_call.1} parent=31 // pred_check
          %p235 = pneg %p108
        $region42: #{tpu_custom_call.1} parent=31 // pred_check_branch
          %237 = sbr.rel (%p235) target = $region44
        $region43: #{tpu_custom_call.1} parent=31 // pred_region
          %239 = dma.done %s232, 16
        $region44: #{tpu_custom_call.1} parent=31 // pred_fallthru
          _
        %p240 = pneg %p54
        %p241 = pneg %p51
        %s242 = sand.u32 %s21, 1
        %s243 = scalar_lea.sflag [#allocation7], %s242
        %s244 = sand.u32 %s69, 1
        %s245 = smul.addr %s244, 512
        %s246 = scalar_lea.vmem [#allocation6], %s245
        %p247 = pneg %p82
        %p248 = pneg %p79
        %s249 = sand.u32 %s21, 1
        %s250 = scalar_lea.sflag [#allocation7], %s249
        %s251 = sand.u32 %s95, 1
        %s252 = scalar_lea.vmem [#allocation8], %s251
        %p253 = pneg %p108
        %p254 = pneg %p105
        %p255 = pneg %p134
        %p256 = pneg %p131
        %s257 = sand.u32 %s121, 1
        %s258 = scalar_lea.sflag [#allocation5], %s257
        %s259 = sand.u32 %s121, 1
        %s260 = scalar_lea.vmem [#allocation9], %s259
        %s261 = smul.u32 4, %s26
        %s262 = smul.u32 16, %s25
        %s263 = smul.u32 4, %s26
        %p264 = scmp.eq.s32.totalorder %s26, 0
        // Predicated region
        $region45: #{tpu_custom_call.1} parent=31 // pred_check
          %p265 = pneg %p264
        $region46: #{tpu_custom_call.1} parent=31 // pred_check_branch
          %267 = sbr.rel (%p265) target = $region48
        $region47: #{tpu_custom_call.1} parent=31 // pred_region
          %268 = vst [vmem:[#allocation2] sm:$0x1] 0.0
        $region48: #{tpu_custom_call.1} parent=31 // pred_fallthru
          _
        %v269 = vld [vmem:[#allocation2] sm:$0x1]
        %v270 = vld [vmem:[#allocation3] sm:$0xf]
        %v271 = vld [vmem:[%s225] sm:$0xff]
        %v272 = vld [vmem:[%s225 + $0x8] sm:$0xff]
        %v273 = vld [vmem:[%s225 + $0x10] sm:$0xff]
        %v274 = vld [vmem:[%s225 + $0x18] sm:$0xff]
        %v275 = vld [vmem:[%s225 + $0x20] sm:$0xff]
        %v276 = vld [vmem:[%s225 + $0x28] sm:$0xff]
        %v277 = vld [vmem:[%s225 + $0x30] sm:$0xff]
        %v278 = vld [vmem:[%s225 + $0x38] sm:$0xff]
        %v279 = vld [vmem:[%s225 + $0x40] sm:$0xff]
        %v280 = vld [vmem:[%s225 + $0x48] sm:$0xff]
        %v281 = vld [vmem:[%s225 + $0x50] sm:$0xff]
        %v282 = vld [vmem:[%s225 + $0x58] sm:$0xff]
        %v283 = vld [vmem:[%s225 + $0x60] sm:$0xff]
        %v284 = vld [vmem:[%s225 + $0x68] sm:$0xff]
        %v285 = vld [vmem:[%s225 + $0x70] sm:$0xff]
        %v286 = vld [vmem:[%s225 + $0x78] sm:$0xff]
        %v287 = vld [vmem:[%s225 + $0x80] sm:$0xff]
        %v288 = vld [vmem:[%s225 + $0x88] sm:$0xff]
        %v289 = vld [vmem:[%s225 + $0x90] sm:$0xff]
        %v290 = vld [vmem:[%s225 + $0x98] sm:$0xff]
        %v291 = vld [vmem:[%s225 + $0xa0] sm:$0xff]
        %v292 = vld [vmem:[%s225 + $0xa8] sm:$0xff]
        %v293 = vld [vmem:[%s225 + $0xb0] sm:$0xff]
        %v294 = vld [vmem:[%s225 + $0xb8] sm:$0xff]
        %v295 = vld [vmem:[%s225 + $0xc0] sm:$0xff]
        %v296 = vld [vmem:[%s225 + $0xc8] sm:$0xff]
        %v297 = vld [vmem:[%s225 + $0xd0] sm:$0xff]
        %v298 = vld [vmem:[%s225 + $0xd8] sm:$0xff]
        %v299 = vld [vmem:[%s225 + $0xe0] sm:$0xff]
        %v300 = vld [vmem:[%s225 + $0xe8] sm:$0xff]
        %v301 = vld [vmem:[%s225 + $0xf0] sm:$0xff]
        %v302 = vld [vmem:[%s225 + $0xf8] sm:$0xff]
        %v303 = vld [vmem:[%s225 + $0x100] sm:$0xff]
        %v304 = vld [vmem:[%s225 + $0x108] sm:$0xff]
        %v305 = vld [vmem:[%s225 + $0x110] sm:$0xff]
        %v306 = vld [vmem:[%s225 + $0x118] sm:$0xff]
        %v307 = vld [vmem:[%s225 + $0x120] sm:$0xff]
        %v308 = vld [vmem:[%s225 + $0x128] sm:$0xff]
        %v309 = vld [vmem:[%s225 + $0x130] sm:$0xff]
        %v310 = vld [vmem:[%s225 + $0x138] sm:$0xff]
        %v311 = vld [vmem:[%s225 + $0x140] sm:$0xff]
        %v312 = vld [vmem:[%s225 + $0x148] sm:$0xff]
        %v313 = vld [vmem:[%s225 + $0x150] sm:$0xff]
        %v314 = vld [vmem:[%s225 + $0x158] sm:$0xff]
        %v315 = vld [vmem:[%s225 + $0x160] sm:$0xff]
        %v316 = vld [vmem:[%s225 + $0x168] sm:$0xff]
        %v317 = vld [vmem:[%s225 + $0x170] sm:$0xff]
        %v318 = vld [vmem:[%s225 + $0x178] sm:$0xff]
        %v319 = vld [vmem:[%s225 + $0x180] sm:$0xff]
        %v320 = vld [vmem:[%s225 + $0x188] sm:$0xff]
        %v321 = vld [vmem:[%s225 + $0x190] sm:$0xff]
        %v322 = vld [vmem:[%s225 + $0x198] sm:$0xff]
        %v323 = vld [vmem:[%s225 + $0x1a0] sm:$0xff]
        %v324 = vld [vmem:[%s225 + $0x1a8] sm:$0xff]
        %v325 = vld [vmem:[%s225 + $0x1b0] sm:$0xff]
        %v326 = vld [vmem:[%s225 + $0x1b8] sm:$0xff]
        %v327 = vld [vmem:[%s225 + $0x1c0] sm:$0xff]
        %v328 = vld [vmem:[%s225 + $0x1c8] sm:$0xff]
        %v329 = vld [vmem:[%s225 + $0x1d0] sm:$0xff]
        %v330 = vld [vmem:[%s225 + $0x1d8] sm:$0xff]
        %v331 = vld [vmem:[%s225 + $0x1e0] sm:$0xff]
        %v332 = vld [vmem:[%s225 + $0x1e8] sm:$0xff]
        %v333 = vld [vmem:[%s225 + $0x1f0] sm:$0xff]
        %v334 = vld [vmem:[%s225 + $0x1f8] sm:$0xff]
        %v336 = vperm.slane %v270, 0
        %v337 = vperm.slane %v270, 1
        %v338 = vperm.slane %v270, 2
        %v339 = vperm.slane %v270, 3
        %344 = vmatpush.xpose.msra.mxu0 %v331
        %345 = vmatpush.xpose.msra.mxu0 %v327
        %346 = vmatpush.xpose.msra.mxu0 %v323
        %347 = vmatpush.xpose.msra.mxu0 %v319
        %348 = vmatpush.xpose.msra.mxu0 %v315
        %349 = vmatpush.xpose.msra.mxu0 %v311
        %350 = vmatpush.xpose.msra.mxu0 %v307
        %351 = vmatpush.xpose.msra.mxu0 %v303
        %352 = vmatpush.xpose.msra.mxu0 %v299
        %353 = vmatpush.xpose.msra.mxu0 %v295
        %354 = vmatpush.xpose.msra.mxu0 %v291
        %355 = vmatpush.xpose.msra.mxu0 %v287
        %356 = vmatpush.xpose.msra.mxu0 %v283
        %357 = vmatpush.xpose.msra.mxu0 %v279
        %358 = vmatpush.xpose.msra.mxu0 %v275
        %359 = vmatpush.xpose.msra.mxu0 %v271
        %360 = vmatmul.f32.gmra.mxu0 %v336
        %v361 = vpop.f32.mrf.mxu0
        %v362 = vadd.f32 0.0, %v361
        %363 = vdwg.mxu0
        %364 = vmatpush.xpose.msra.mxu0 %v332
        %365 = vmatpush.xpose.msra.mxu0 %v328
        %366 = vmatpush.xpose.msra.mxu0 %v324
        %367 = vmatpush.xpose.msra.mxu0 %v320
        %368 = vmatpush.xpose.msra.mxu0 %v316
        %369 = vmatpush.xpose.msra.mxu0 %v312
        %370 = vmatpush.xpose.msra.mxu0 %v308
        %371 = vmatpush.xpose.msra.mxu0 %v304
        %372 = vmatpush.xpose.msra.mxu0 %v300
        %373 = vmatpush.xpose.msra.mxu0 %v296
        %374 = vmatpush.xpose.msra.mxu0 %v292
        %375 = vmatpush.xpose.msra.mxu0 %v288
        %376 = vmatpush.xpose.msra.mxu0 %v284
        %377 = vmatpush.xpose.msra.mxu0 %v280
        %378 = vmatpush.xpose.msra.mxu0 %v276
        %379 = vmatpush.xpose.msra.mxu0 %v272
        %380 = vmatmul.f32.gmra.mxu0 %v337
        %v381 = vpop.f32.mrf.mxu0
        %v382 = vadd.f32 %v362, %v381
        %383 = vdwg.mxu0
        %384 = vmatpush.xpose.msra.mxu0 %v333
        %385 = vmatpush.xpose.msra.mxu0 %v329
        %386 = vmatpush.xpose.msra.mxu0 %v325
        %387 = vmatpush.xpose.msra.mxu0 %v321
        %388 = vmatpush.xpose.msra.mxu0 %v317
        %389 = vmatpush.xpose.msra.mxu0 %v313
        %390 = vmatpush.xpose.msra.mxu0 %v309
        %391 = vmatpush.xpose.msra.mxu0 %v305
        %392 = vmatpush.xpose.msra.mxu0 %v301
        %393 = vmatpush.xpose.msra.mxu0 %v297
        %394 = vmatpush.xpose.msra.mxu0 %v293
        %395 = vmatpush.xpose.msra.mxu0 %v289
        %396 = vmatpush.xpose.msra.mxu0 %v285
        %397 = vmatpush.xpose.msra.mxu0 %v281
        %398 = vmatpush.xpose.msra.mxu0 %v277
        %399 = vmatpush.xpose.msra.mxu0 %v273
        %400 = vmatmul.f32.gmra.mxu0 %v338
        %v401 = vpop.f32.mrf.mxu0
        %v402 = vadd.f32 %v382, %v401
        %403 = vdwg.mxu0
        %404 = vmatpush.xpose.msra.mxu0 %v334
        %405 = vmatpush.xpose.msra.mxu0 %v330
        %406 = vmatpush.xpose.msra.mxu0 %v326
        %407 = vmatpush.xpose.msra.mxu0 %v322
        %408 = vmatpush.xpose.msra.mxu0 %v318
        %409 = vmatpush.xpose.msra.mxu0 %v314
        %410 = vmatpush.xpose.msra.mxu0 %v310
        %411 = vmatpush.xpose.msra.mxu0 %v306
        %412 = vmatpush.xpose.msra.mxu0 %v302
        %413 = vmatpush.xpose.msra.mxu0 %v298
        %414 = vmatpush.xpose.msra.mxu0 %v294
        %415 = vmatpush.xpose.msra.mxu0 %v290
        %416 = vmatpush.xpose.msra.mxu0 %v286
        %417 = vmatpush.xpose.msra.mxu0 %v282
        %418 = vmatpush.xpose.msra.mxu0 %v278
        %419 = vmatpush.xpose.msra.mxu0 %v274
        %420 = vmatmul.f32.gmra.mxu0 %v339
        %v421 = vpop.f32.mrf.mxu0
        %v422 = vadd.f32 %v402, %v421
        %423 = vdwg.mxu0
        %v424 = vadd.f32 %v269, %v422
        %425 = vst [vmem:[#allocation2] sm:$0x1] %v424
        // Predicated region
        $region49: #{tpu_custom_call.1} parent=31 // pred_check
          %p426 = pneg %p264
        $region50: #{tpu_custom_call.1} parent=31 // pred_check_branch
          %428 = sbr.rel (%p426) target = $region52
        $region51: #{tpu_custom_call.1} parent=31 // pred_region
          %v429 = vld [vmem:[#allocation2] sm:$0x1]
          %v430 = vld [vmem:[%s234] sm:$0x1]
          %v431 = vadd.f32 %v429, %v430
          %v432 = vxor.u32 %v431, 2147483648
          %v433 = vmul.f32 %v432, 1.442695
          %v434 = vpow.pop %v433
          %v435 = vadd.f32 %v434, 1.0
          %v436 = vrcp.pop %v435
          %v437 = vmul.f32 %v435, %v436
          %v438 = vsub.f32 1.0, %v437
          %v439 = vmul.f32 %v436, %v438
          %v440 = vadd.f32 %v436, %v439
          %vm441 = vweird.f32 %v435
          %vm442 = vweird.f32 %v436
          %vm443 = vmor %vm441, %vm442
          %v444 = vsel %vm443, %v436, %v440
          %v445 = vand.u32 2147483647, %v435
          %vm446 = vcmp.eq.f32.partialorder %v445, 8.507059e+37
          %v447 = vand.u32 %v435, 2147483648
          %v448 = vor.u32 1.1754944e-38, %v447
          %v449 = vsel %vm446, %v448, %v444
          %v450 = vmul.f32 1.0, %v449
          %451 = vst [vmem:[%s260] sm:$0x1] %v450
        $region52: #{tpu_custom_call.1} parent=31 // pred_fallthru
          _
        %s452 = sand.u32 %s121, 1
        %s453 = scalar_lea.sflag [#allocation5], %s452
        %s454 = sand.u32 %s121, 1
        %s455 = scalar_lea.vmem [#allocation9], %s454
        // Predicated region
        $region53: #{tpu_custom_call.1} parent=31 // pred_check
          %p456 = pneg %p131
        $region54: #{tpu_custom_call.1} parent=31 // pred_check_branch
          %458 = sbr.rel (%p456) target = $region56
        $region55: #{tpu_custom_call.1} parent=31 // pred_region
          %460 = vsyncadd %s453, 0
          %s461 = scalar_lea.hbm %s3, %s25
          %s463 = sshll.u32 %s455, 4
          %s464 = int_to_ptr.vmem [resolvable:$true] %s463
          %s465 = sshll.u32 %s461, 4
          %s466 = int_to_ptr.hbm [resolvable:$true] %s465
          %468 = dma.vmem_to_hbm [thread:$0]  %s464, 16, %s466, %s453
        $region56: #{tpu_custom_call.1} parent=31 // pred_fallthru
          _
      $region32: #{tpu_custom_call.1} parent=5 // pred_fallthru
        _
      %p469 = scmp.le.s32.totalorder 2, %s16
      // Predicated region
      $region57: #{tpu_custom_call.1} parent=5 // pred_check
        %p470 = pneg %p469
      $region58: #{tpu_custom_call.1} parent=5 // pred_check_branch
        %472 = sbr.rel (%p470) target = $region60
      $region59: #{tpu_custom_call.1} parent=5 // pred_region
        %s473 = ssub.s32 %s16, 2
        // Predicated region
        $region61: #{tpu_custom_call.1} parent=59 // pred_check
          %p474 = pneg %p137
        $region62: #{tpu_custom_call.1} parent=59 // pred_check_branch
          %476 = sbr.rel (%p474) target = $region64
        $region63: #{tpu_custom_call.1} parent=59 // pred_region
          %s477 = sand.u32 %s122, 1
          %s478 = scalar_lea.sflag [#allocation5], %s477
          %s479 = sand.u32 %s122, 1
          %s480 = scalar_lea.vmem [#allocation9], %s479
          %482 = dma.done %s478, 16
        $region64: #{tpu_custom_call.1} parent=59 // pred_fallthru
          _
      $region60: #{tpu_custom_call.1} parent=5 // pred_fallthru
        _
    $region6: #{tpu_custom_call.1} parent=1 // loop_footer
      %s20 = sadd.s32 1, %s16
    $region7: #{tpu_custom_call.1} parent=1 // loop_footer_branch
      %15 = sbr.rel target = $region3
    $region8: #{tpu_custom_call.1} parent=1 // loop_exit
      _
    %483 = vsyncpa [#allocation4], 1
    %s484 = scalar_lea.sflag [#allocation4], 1
    %485 = vsyncpa %s484, 1
    %486 = vsyncpa [#allocation7], 1
    %s487 = scalar_lea.sflag [#allocation7], 1
    %488 = vsyncpa %s487, 1
    %489 = vsyncpa [#allocation5], 1
    %s490 = scalar_lea.sflag [#allocation5], 1
    %491 = vsyncpa %s490, 1

</llo_original>
